<compile_context>
chip_gen: v7x
topology: tpu7x:2x2x1
jax: 0.10.0
libtpu: 0.0.40
codegen_flags: <defaults>
</compile_context>

<pallas_src>
import functools

import jax
import jax.numpy as jnp
from jax.experimental import pallas as pl
from jax.experimental.pallas import tpu as pltpu


def _ceil8(n):
    return ((n + 7) // 8) * 8


def _fused_cnn1d_kernel(x_ref, shift_ref, *wb_and_out,
                        layer_cfg, relu_flags, bias_flags, shift_slots):
    """Fused causal Conv1d stack (+bias+ReLU), lane-dense (C, B*L) layout.

    x_ref     : (Cin0_pad, N) f32     input slab, N = B*L on the 128-lane axis
    shift_ref : (n_shift, N, N) bf16  banded causal-shift matrices; tap_s = cur @ S_s
                                      (S_s[q,p] = 1 iff p == q+s within the same
                                       length-L segment -> shift + zero fill = causal pad)
    then per layer i:  w_i (Cout_pad, K*Cin_pad) bf16,  b_i (Cout_pad, 1) f32
    o_ref     : (Cout_last_pad, N)    lane-dense output slab
    """
    n_layers = len(layer_cfg)
    wb = wb_and_out[:2 * n_layers]
    o_ref = wb_and_out[2 * n_layers]

    cur = x_ref[...].astype(jnp.float32)                      # (Cin_pad, N)
    for i, (K, _c_in_pad, _c_out_pad) in enumerate(layer_cfg):
        w_ref, b_ref = wb[2 * i], wb[2 * i + 1]
        cur_bf = cur.astype(jnp.bfloat16)

        # im2col as values: tap k is the input shifted right by s = K-1-k within
        # each length-L batch segment, with zeros filled at the segment head
        # (== the module's causal front-pad).  Done as one MXU dot with a
        # constant 0/1 banded matrix: exact (<=1 nonzero per output), and the
        # MXU has huge slack at these channel counts.
        taps = []
        for k in range(K):
            s = K - 1 - k
            if s == 0:
                taps.append(cur)
            else:
                taps.append(jnp.dot(cur_bf, shift_ref[shift_slots[s]],
                                    preferred_element_type=jnp.float32))
        # 8-row-aligned sublane concat (channels padded to multiples of 8).
        col = jnp.concatenate(taps, axis=0).astype(jnp.bfloat16)   # (K*Cin_pad, N)

        # ONE 2-D MXU dot per layer: (Cout, K*Cin) @ (K*Cin, B*L) -> (Cout, B*L).
        acc = jnp.dot(w_ref[...], col, preferred_element_type=jnp.float32)
        if bias_flags[i]:
            acc = acc + b_ref[...]                              # (Cout_pad, 1) broadcast
        if relu_flags[i]:
            acc = jnp.maximum(acc, 0.0)
        cur = acc

    o_ref[...] = cur.astype(o_ref.dtype)


def cnn1d_forward(x, params, *, kernel_sizes, causal_pad, use_bias, activations):
    """Mirrors CNN1D.forward for the lowered configuration.

    x: (B, L, C_in) channels-last (same tensor the PyTorch forward receives).
    params: list of (w, b) with w: (K, C_in, C_out), b: (C_out,).
    Returns (B, L, C_out_last).
    """
    assert causal_pad, "only the causal_pad=True configuration is lowered here"
    B, L, c0 = x.shape
    N = B * L
    n = len(params)
    chans = [c0] + [w.shape[-1] for (w, _) in params]
    # Pad every channel count up to a multiple of 8 so all sublane blocks are
    # (8,128)-aligned inside the kernel (padded rows/cols carry zero weights).
    cpad = [_ceil8(c) for c in chans]
    layer_cfg = tuple((kernel_sizes[i], cpad[i], cpad[i + 1]) for i in range(n))
    relu_flags = tuple(a == "relu" for a in activations)
    bias_flags = tuple(bool(b) for b in use_bias)

    # Distinct causal shifts needed across layers (s = 1 .. K-1).
    shifts = sorted({s for K in kernel_sizes for s in range(1, K)})
    shift_slots = {s: i for i, s in enumerate(shifts)}
    q = jnp.arange(N)[:, None]
    p = jnp.arange(N)[None, :]
    same_seg = (p // L) == (q // L)
    if shifts:
        shift_mats = jnp.stack(
            [((p - q == s) & same_seg).astype(jnp.bfloat16) for s in shifts])
    else:
        shift_mats = jnp.zeros((1, N, N), jnp.bfloat16)
    n_shift = shift_mats.shape[0]

    # Lane-dense input slab (C0_pad, B*L).  Layout plumbing kept in the wrapper
    # (single ~8 KB XLA op); see header TODO for the in-kernel alternative.
    x_t = jnp.transpose(x, (2, 0, 1)).reshape(c0, N)
    if cpad[0] > c0:
        x_t = jnp.pad(x_t, ((0, cpad[0] - c0), (0, 0)))

    # Pre-pack parameters once: w (K, Cin, Cout) -> bf16 (Cout_pad, K*Cin_pad),
    # bias -> f32 (Cout_pad, 1); zero pad rows/cols so the MXU dot ignores them.
    packed = []
    in_specs = [
        pl.BlockSpec((cpad[0], N), lambda i: (0, 0)),
        pl.BlockSpec((n_shift, N, N), lambda i: (0, 0, 0)),
    ]
    for li, (w, b) in enumerate(params):
        K, c_in, c_out = w.shape
        ci_p, co_p = cpad[li], cpad[li + 1]
        w_t = jnp.transpose(w, (2, 0, 1)).astype(jnp.bfloat16)       # (c_out, K, c_in)
        w_t = jnp.pad(w_t, ((0, 0), (0, 0), (0, ci_p - c_in)))       # pad input chans
        wp = jnp.zeros((co_p, K * ci_p), jnp.bfloat16)
        wp = wp.at[:c_out].set(w_t.reshape(c_out, K * ci_p))
        bp = jnp.zeros((co_p, 1), jnp.float32).at[:c_out, 0].set(b.astype(jnp.float32))
        packed += [wp, bp]
        in_specs.append(pl.BlockSpec((co_p, K * ci_p), lambda i: (0, 0)))
        in_specs.append(pl.BlockSpec((co_p, 1), lambda i: (0, 0)))

    kernel = functools.partial(
        _fused_cnn1d_kernel, layer_cfg=layer_cfg, relu_flags=relu_flags,
        bias_flags=bias_flags, shift_slots=shift_slots)

    y_t = pl.pallas_call(
        kernel,
        out_shape=jax.ShapeDtypeStruct((cpad[-1], N), x.dtype),
        grid=(1,),   # whole batch in ONE step: no per-step pipeline overhead
        in_specs=in_specs,
        out_specs=pl.BlockSpec((cpad[-1], N), lambda i: (0, 0)),
        compiler_params=pltpu.CompilerParams(
            dimension_semantics=("arbitrary",)),
    )(x_t, shift_mats, *packed)

    # Back to the module's (B, L, C_out) output; padded channel rows dropped.
    y = y_t[:chans[-1]].reshape(chans[-1], B, L)
    return jnp.transpose(y, (1, 2, 0))


def init_params(key, in_channels, out_channels, kernel_sizes, dtype=jnp.float32):
    """Deterministic PyTorch-Conv1d-style init: U(-1/sqrt(fan_in), 1/sqrt(fan_in))."""
    params = []
    c_in = in_channels
    for i, c_out in enumerate(out_channels):
        K = kernel_sizes[i]
        key, kw, kb = jax.random.split(key, 3)
        fan_in = c_in * K
        bound = 1.0 / (fan_in ** 0.5)
        # Stored tap-major, channels-last: (K, C_in, C_out).
        w = jax.random.uniform(kw, (K, c_in, c_out), dtype, -bound, bound)
        b = jax.random.uniform(kb, (c_out,), dtype, -bound, bound)
        params.append((w, b))
        c_in = c_out
    return params


def _reference_forward(x, params, *, kernel_sizes, causal_pad, use_bias, activations):
    """Pure-JAX reference (same math) for a correctness check."""
    out = x
    for i, (w, b) in enumerate(params):
        K = kernel_sizes[i]
        inp = jnp.pad(out, ((0, 0), (K - 1, 0), (0, 0))) if causal_pad else out
        L_out = inp.shape[1] - K + 1
        acc = jnp.zeros((inp.shape[0], L_out, w.shape[-1]), jnp.float32)
        for k in range(K):
            acc = acc + jnp.einsum(
                "blc,co->blo", inp[:, k:k + L_out, :], w[k],
                precision=jax.lax.Precision.HIGHEST,
            )
        if use_bias[i]:
            acc = acc + b[None, None, :]
        if activations[i] == "relu":
            acc = jnp.maximum(acc, 0.0)
        out = acc.astype(x.dtype)
    return out


if __name__ == "__main__":
    # Small deterministic example consistent with the module's (B, L, C) input.
    # B*L = 128 => the flattened batch*length axis fills the 128 lanes exactly.
    B, L = 8, 16
    in_channels = 4
    out_channels = [8, 8]
    kernel_sizes = [3, 3]
    use_bias = [True, True]
    activations = ["relu", "relu"]
    causal_pad = True

    key = jax.random.PRNGKey(0)
    kx, kp = jax.random.split(key)
    x = jax.random.normal(kx, (B, L, in_channels), jnp.float32)
    params = init_params(kp, in_channels, out_channels, kernel_sizes)

    fwd = jax.jit(functools.partial(
        cnn1d_forward, kernel_sizes=kernel_sizes, causal_pad=causal_pad,
        use_bias=use_bias, activations=activations))
    y = jax.block_until_ready(fwd(x, params))

    y_ref = _reference_forward(
        x, params, kernel_sizes=kernel_sizes, causal_pad=causal_pad,
        use_bias=use_bias, activations=activations,
    )

    assert y.shape == (B, L, out_channels[-1]), y.shape
    assert jnp.allclose(y, y_ref, rtol=1e-2, atol=1e-2), "mismatch vs reference"

    print("KERNEL_OK")
</pallas_src>

<mosaic_0001>
module attributes {stable_mosaic.version = 11 : i64} {
  func.func @_fused_cnn1d_kernel(%arg0: i32, %arg1: memref<8x128xf32, #tpu.memory_space<vmem>>, %arg2: memref<2x128x128xbf16, #tpu.memory_space<vmem>>, %arg3: memref<8x24xbf16, #tpu.memory_space<vmem>>, %arg4: memref<8x1xf32, #tpu.memory_space<vmem>>, %arg5: memref<8x24xbf16, #tpu.memory_space<vmem>>, %arg6: memref<8x1xf32, #tpu.memory_space<vmem>>, %arg7: memref<8x128xf32, #tpu.memory_space<vmem>>) attributes {dimension_semantics = [#tpu.dimension_semantics<arbitrary>], iteration_bounds = array<i64: 1>, scalar_prefetch = 0 : i64, scratch_operands = 0 : i64, tpu.core_type = #tpu.core_type<tc>, window_params = [{pipeline_mode = #tpu.pipeline_mode<synchronous>, transform_indices = @transform_0, window_bounds = array<i64: 8, 128>}, {pipeline_mode = #tpu.pipeline_mode<synchronous>, transform_indices = @transform_1, window_bounds = array<i64: 2, 128, 128>}, {pipeline_mode = #tpu.pipeline_mode<synchronous>, transform_indices = @transform_2, window_bounds = array<i64: 8, 24>}, {pipeline_mode = #tpu.pipeline_mode<synchronous>, transform_indices = @transform_3, window_bounds = array<i64: 8, 1>}, {pipeline_mode = #tpu.pipeline_mode<synchronous>, transform_indices = @transform_4, window_bounds = array<i64: 8, 24>}, {pipeline_mode = #tpu.pipeline_mode<synchronous>, transform_indices = @transform_5, window_bounds = array<i64: 8, 1>}, {pipeline_mode = #tpu.pipeline_mode<synchronous>, transform_indices = @transform_6, window_bounds = array<i64: 8, 128>}]} {
    %c0 = arith.constant 0 : index
    %c0_0 = arith.constant 0 : index
    %0 = vector.load %arg1[%c0, %c0_0] : memref<8x128xf32, #tpu.memory_space<vmem>>, vector<8x128xf32>
    %1 = arith.truncf %0 : vector<8x128xf32> to vector<8x128xbf16>
    %c1 = arith.constant 1 : index
    %c0_1 = arith.constant 0 : index
    %c0_2 = arith.constant 0 : index
    %2 = vector.load %arg2[%c1, %c0_1, %c0_2] : memref<2x128x128xbf16, #tpu.memory_space<vmem>>, vector<1x128x128xbf16>
    %3 = vector.shape_cast %2 : vector<1x128x128xbf16> to vector<128x128xbf16>
    %cst = arith.constant dense<0.000000e+00> : vector<8x128xf32>
    %4 = tpu.matmul %1, %3, %cst {dimension_numbers = #tpu.dot_dimension_numbers<[1], [0], [0], [1], [0, 0, 1, 1], [], []>} : vector<8x128xbf16>, vector<128x128xbf16>, vector<8x128xf32> -> vector<8x128xf32>
    %c0_3 = arith.constant 0 : index
    %c0_4 = arith.constant 0 : index
    %c0_5 = arith.constant 0 : index
    %5 = vector.load %arg2[%c0_3, %c0_4, %c0_5] : memref<2x128x128xbf16, #tpu.memory_space<vmem>>, vector<1x128x128xbf16>
    %6 = vector.shape_cast %5 : vector<1x128x128xbf16> to vector<128x128xbf16>
    %cst_6 = arith.constant dense<0.000000e+00> : vector<8x128xf32>
    %7 = tpu.matmul %1, %6, %cst_6 {dimension_numbers = #tpu.dot_dimension_numbers<[1], [0], [0], [1], [0, 0, 1, 1], [], []>} : vector<8x128xbf16>, vector<128x128xbf16>, vector<8x128xf32> -> vector<8x128xf32>
    %8 = tpu.concatenate %4, %7, %0 in 0 : vector<8x128xf32>, vector<8x128xf32>, vector<8x128xf32> -> vector<24x128xf32>
    %9 = arith.truncf %8 : vector<24x128xf32> to vector<24x128xbf16>
    %c0_7 = arith.constant 0 : index
    %c0_8 = arith.constant 0 : index
    %10 = vector.load %arg3[%c0_7, %c0_8] : memref<8x24xbf16, #tpu.memory_space<vmem>>, vector<8x24xbf16>
    %cst_9 = arith.constant dense<0.000000e+00> : vector<8x128xf32>
    %11 = tpu.matmul %10, %9, %cst_9 {dimension_numbers = #tpu.dot_dimension_numbers<[1], [0], [0], [1], [0, 0, 1, 1], [], []>} : vector<8x24xbf16>, vector<24x128xbf16>, vector<8x128xf32> -> vector<8x128xf32>
    %c0_10 = arith.constant 0 : index
    %c0_11 = arith.constant 0 : index
    %12 = vector.load %arg4[%c0_10, %c0_11] : memref<8x1xf32, #tpu.memory_space<vmem>>, vector<8x1xf32>
    %13 = vector.broadcast %12 : vector<8x1xf32> to vector<8x128xf32>
    %14 = arith.addf %11, %13 : vector<8x128xf32>
    %cst_12 = arith.constant 0.000000e+00 : f32
    %15 = vector.broadcast %cst_12 : f32 to vector<8x128xf32>
    %16 = arith.maximumf %14, %15 : vector<8x128xf32>
    %17 = arith.truncf %16 : vector<8x128xf32> to vector<8x128xbf16>
    %c1_13 = arith.constant 1 : index
    %c0_14 = arith.constant 0 : index
    %c0_15 = arith.constant 0 : index
    %18 = vector.load %arg2[%c1_13, %c0_14, %c0_15] : memref<2x128x128xbf16, #tpu.memory_space<vmem>>, vector<1x128x128xbf16>
    %19 = vector.shape_cast %18 : vector<1x128x128xbf16> to vector<128x128xbf16>
    %cst_16 = arith.constant dense<0.000000e+00> : vector<8x128xf32>
    %20 = tpu.matmul %17, %19, %cst_16 {dimension_numbers = #tpu.dot_dimension_numbers<[1], [0], [0], [1], [0, 0, 1, 1], [], []>} : vector<8x128xbf16>, vector<128x128xbf16>, vector<8x128xf32> -> vector<8x128xf32>
    %c0_17 = arith.constant 0 : index
    %c0_18 = arith.constant 0 : index
    %c0_19 = arith.constant 0 : index
    %21 = vector.load %arg2[%c0_17, %c0_18, %c0_19] : memref<2x128x128xbf16, #tpu.memory_space<vmem>>, vector<1x128x128xbf16>
    %22 = vector.shape_cast %21 : vector<1x128x128xbf16> to vector<128x128xbf16>
    %cst_20 = arith.constant dense<0.000000e+00> : vector<8x128xf32>
    %23 = tpu.matmul %17, %22, %cst_20 {dimension_numbers = #tpu.dot_dimension_numbers<[1], [0], [0], [1], [0, 0, 1, 1], [], []>} : vector<8x128xbf16>, vector<128x128xbf16>, vector<8x128xf32> -> vector<8x128xf32>
    %24 = tpu.concatenate %20, %23, %16 in 0 : vector<8x128xf32>, vector<8x128xf32>, vector<8x128xf32> -> vector<24x128xf32>
    %25 = arith.truncf %24 : vector<24x128xf32> to vector<24x128xbf16>
    %c0_21 = arith.constant 0 : index
    %c0_22 = arith.constant 0 : index
    %26 = vector.load %arg5[%c0_21, %c0_22] : memref<8x24xbf16, #tpu.memory_space<vmem>>, vector<8x24xbf16>
    %cst_23 = arith.constant dense<0.000000e+00> : vector<8x128xf32>
    %27 = tpu.matmul %26, %25, %cst_23 {dimension_numbers = #tpu.dot_dimension_numbers<[1], [0], [0], [1], [0, 0, 1, 1], [], []>} : vector<8x24xbf16>, vector<24x128xbf16>, vector<8x128xf32> -> vector<8x128xf32>
    %c0_24 = arith.constant 0 : index
    %c0_25 = arith.constant 0 : index
    %28 = vector.load %arg6[%c0_24, %c0_25] : memref<8x1xf32, #tpu.memory_space<vmem>>, vector<8x1xf32>
    %29 = vector.broadcast %28 : vector<8x1xf32> to vector<8x128xf32>
    %30 = arith.addf %27, %29 : vector<8x128xf32>
    %cst_26 = arith.constant 0.000000e+00 : f32
    %31 = vector.broadcast %cst_26 : f32 to vector<8x128xf32>
    %32 = arith.maximumf %30, %31 : vector<8x128xf32>
    %c0_27 = arith.constant 0 : index
    %c0_28 = arith.constant 0 : index
    %33 = vector.load %arg7[%c0_27, %c0_28] : memref<8x128xf32, #tpu.memory_space<vmem>>, vector<8x128xf32>
    tpu.vector_store %arg7[%c0_27, %c0_28], %32 {strides = array<i32>} : memref<8x128xf32, #tpu.memory_space<vmem>>, vector<8x128xf32>,
    return
  }
  func.func @transform_0(%arg0: i32) -> (i32, i32) {
    %c0_i32 = arith.constant 0 : i32
    %c0_i32_0 = arith.constant 0 : i32
    %c0_i32_1 = arith.constant 0 : i32
    return %c0_i32, %c0_i32_0 : i32, i32
  }
  func.func @transform_1(%arg0: i32) -> (i32, i32, i32) {
    %c0_i32 = arith.constant 0 : i32
    %c0_i32_0 = arith.constant 0 : i32
    %c0_i32_1 = arith.constant 0 : i32
    %c0_i32_2 = arith.constant 0 : i32
    return %c0_i32, %c0_i32_0, %c0_i32_1 : i32, i32, i32
  }
  func.func @transform_2(%arg0: i32) -> (i32, i32) {
    %c0_i32 = arith.constant 0 : i32
    %c0_i32_0 = arith.constant 0 : i32
    %c0_i32_1 = arith.constant 0 : i32
    return %c0_i32, %c0_i32_0 : i32, i32
  }
  func.func @transform_3(%arg0: i32) -> (i32, i32) {
    %c0_i32 = arith.constant 0 : i32
    %c0_i32_0 = arith.constant 0 : i32
    %c0_i32_1 = arith.constant 0 : i32
    return %c0_i32, %c0_i32_0 : i32, i32
  }
  func.func @transform_4(%arg0: i32) -> (i32, i32) {
    %c0_i32 = arith.constant 0 : i32
    %c0_i32_0 = arith.constant 0 : i32
    %c0_i32_1 = arith.constant 0 : i32
    return %c0_i32, %c0_i32_0 : i32, i32
  }
  func.func @transform_5(%arg0: i32) -> (i32, i32) {
    %c0_i32 = arith.constant 0 : i32
    %c0_i32_0 = arith.constant 0 : i32
    %c0_i32_1 = arith.constant 0 : i32
    return %c0_i32, %c0_i32_0 : i32, i32
  }
  func.func @transform_6(%arg0: i32) -> (i32, i32) {
    %c0_i32 = arith.constant 0 : i32
    %c0_i32_0 = arith.constant 0 : i32
    %c0_i32_1 = arith.constant 0 : i32
    return %c0_i32, %c0_i32_0 : i32, i32
  }
}

</mosaic_0001>

<llo_original>
// kernel: cnn1d_forward.1
$region0: #{cnn1d_forward.1}
  #allocation0 [shape = 'u32[]', space=smem, size = 0x4, offset = 0x4, fixed_abs, tag = 'smem constant byte address 0x4 - core index']
  #allocation1 [shape = 'u32[144,128]{1,0:T(1,128)}', space=vmem, size = 0x12000, scoped, tag = 'internal scratch']
  %s0 = inlined_call_operand.vmem [shape: f32[8,128], index: 0, kind: input, shape index: {}]
  %s1 = inlined_call_operand.vmem [shape: bf16[2,128,128], index: 1, kind: input, shape index: {}]
  %s2 = inlined_call_operand.vmem [shape: bf16[8,24], index: 2, kind: input, shape index: {}]
  %s3 = inlined_call_operand.vmem [shape: f32[8,1], index: 3, kind: input, shape index: {}]
  %s4 = inlined_call_operand.vmem [shape: bf16[8,24], index: 4, kind: input, shape index: {}]
  %s5 = inlined_call_operand.vmem [shape: f32[8,1], index: 5, kind: input, shape index: {}]
  %s6 = inlined_call_operand.vmem [shape: f32[8,128], index: 6, kind: output, shape index: {}]
  %s7 = sld [smem:[#allocation0]]
  $region34: #{cnn1d_forward.1} parent=0
    _
  %s9 = ssub.s32 1, %s7
  %s10 = scalar_select 0, %s9, %s7
  // Predicated region
  $region2: #{cnn1d_forward.1} parent=0 // pred_check
    _
  $region3: #{cnn1d_forward.1} parent=0 // pred_check_branch
    %12 = sbr.rel (0) target = $region5
  $region4: #{cnn1d_forward.1} parent=0 // pred_region
    _
  $region5: #{cnn1d_forward.1} parent=0 // pred_fallthru
    _
  // Predicated region
  $region6: #{cnn1d_forward.1} parent=0 // pred_check
    _
  $region7: #{cnn1d_forward.1} parent=0 // pred_check_branch
    %14 = sbr.rel (0) target = $region9
  $region8: #{cnn1d_forward.1} parent=0 // pred_region
    _
  $region9: #{cnn1d_forward.1} parent=0 // pred_fallthru
    _
  // Predicated region
  $region10: #{cnn1d_forward.1} parent=0 // pred_check
    _
  $region11: #{cnn1d_forward.1} parent=0 // pred_check_branch
    %16 = sbr.rel (0) target = $region13
  $region12: #{cnn1d_forward.1} parent=0 // pred_region
    _
  $region13: #{cnn1d_forward.1} parent=0 // pred_fallthru
    _
  // Predicated region
  $region14: #{cnn1d_forward.1} parent=0 // pred_check
    _
  $region15: #{cnn1d_forward.1} parent=0 // pred_check_branch
    %18 = sbr.rel (0) target = $region17
  $region16: #{cnn1d_forward.1} parent=0 // pred_region
    _
  $region17: #{cnn1d_forward.1} parent=0 // pred_fallthru
    _
  // Predicated region
  $region18: #{cnn1d_forward.1} parent=0 // pred_check
    _
  $region19: #{cnn1d_forward.1} parent=0 // pred_check_branch
    %20 = sbr.rel (0) target = $region21
  $region20: #{cnn1d_forward.1} parent=0 // pred_region
    _
  $region21: #{cnn1d_forward.1} parent=0 // pred_fallthru
    _
  // Predicated region
  $region22: #{cnn1d_forward.1} parent=0 // pred_check
    _
  $region23: #{cnn1d_forward.1} parent=0 // pred_check_branch
    %22 = sbr.rel (0) target = $region25
  $region24: #{cnn1d_forward.1} parent=0 // pred_region
    _
  $region25: #{cnn1d_forward.1} parent=0 // pred_fallthru
    _
  %v24 = vld [vmem:[%s0] sm:$0xff]
  %v25 = vpack.c.bf16 %v24, %v24
  %s26 = scalar_lea.vmem %s1, 64
  %v27 = vld [vmem:[%s26] sm:$0xf]
  %v28 = vld [vmem:[%s26 + $0x4] sm:$0xf]
  %v29 = vld [vmem:[%s26 + $0x8] sm:$0xf]
  %v30 = vld [vmem:[%s26 + $0xc] sm:$0xf]
  %v31 = vld [vmem:[%s26 + $0x10] sm:$0xf]
  %v32 = vld [vmem:[%s26 + $0x14] sm:$0xf]
  %v33 = vld [vmem:[%s26 + $0x18] sm:$0xf]
  %v34 = vld [vmem:[%s26 + $0x1c] sm:$0xf]
  %v35 = vld [vmem:[%s26 + $0x20] sm:$0xf]
  %v36 = vld [vmem:[%s26 + $0x24] sm:$0xf]
  %v37 = vld [vmem:[%s26 + $0x28] sm:$0xf]
  %v38 = vld [vmem:[%s26 + $0x2c] sm:$0xf]
  %v39 = vld [vmem:[%s26 + $0x30] sm:$0xf]
  %v40 = vld [vmem:[%s26 + $0x34] sm:$0xf]
  %v41 = vld [vmem:[%s26 + $0x38] sm:$0xf]
  %v42 = vld [vmem:[%s26 + $0x3c] sm:$0xf]
  %v59 = vunpack.c.l.b16 %v27
  %v60 = vunpack.c.l.b16 %v28
  %v61 = vunpack.c.l.b16 %v29
  %v62 = vunpack.c.l.b16 %v30
  %v63 = vunpack.c.l.b16 %v31
  %v64 = vunpack.c.l.b16 %v32
  %v65 = vunpack.c.l.b16 %v33
  %v66 = vunpack.c.l.b16 %v34
  %v67 = vunpack.c.l.b16 %v35
  %v68 = vunpack.c.l.b16 %v36
  %v69 = vunpack.c.l.b16 %v37
  %v70 = vunpack.c.l.b16 %v38
  %v71 = vunpack.c.l.b16 %v39
  %v72 = vunpack.c.l.b16 %v40
  %v73 = vunpack.c.l.b16 %v41
  %v74 = vunpack.c.l.b16 %v42
  %v75 = vpack.c.b16 %v60, %v59
  %v76 = vpack.c.b16 %v62, %v61
  %v77 = vpack.c.b16 %v64, %v63
  %v78 = vpack.c.b16 %v66, %v65
  %v79 = vpack.c.b16 %v68, %v67
  %v80 = vpack.c.b16 %v70, %v69
  %v81 = vpack.c.b16 %v72, %v71
  %v82 = vpack.c.b16 %v74, %v73
  %91 = vmatprep.subr.bf16.mxu0 0
  %92 = vmatpush1.bf16.msra.mxu0 %v75
  %93 = vmatprep.subr.bf16.mxu0 0
  %94 = vmatpush1.bf16.msra.mxu0 %v76
  %95 = vmatprep.subr.bf16.mxu0 0
  %96 = vmatpush1.bf16.msra.mxu0 %v77
  %97 = vmatprep.subr.bf16.mxu0 0
  %98 = vmatpush1.bf16.msra.mxu0 %v78
  %99 = vmatprep.subr.bf16.mxu0 0
  %100 = vmatpush1.bf16.msra.mxu0 %v79
  %101 = vmatprep.subr.bf16.mxu0 0
  %102 = vmatpush1.bf16.msra.mxu0 %v80
  %103 = vmatprep.subr.bf16.mxu0 0
  %104 = vmatpush1.bf16.msra.mxu0 %v81
  %105 = vmatprep.subr.bf16.mxu0 0
  %106 = vmatpush1.bf16.msra.mxu0 %v82
  %107 = vmatprep.subr.bf16.mxu0 0
  %108 = vmatpush1.bf16.msra.mxu0 0
  %109 = vmatprep.subr.bf16.mxu0 0
  %110 = vmatpush1.bf16.msra.mxu0 0
  %111 = vmatprep.subr.bf16.mxu0 0
  %112 = vmatpush1.bf16.msra.mxu0 0
  %113 = vmatprep.subr.bf16.mxu0 0
  %114 = vmatpush1.bf16.msra.mxu0 0
  %115 = vmatprep.subr.bf16.mxu0 0
  %116 = vmatpush1.bf16.msra.mxu0 0
  %117 = vmatprep.subr.bf16.mxu0 0
  %118 = vmatpush1.bf16.msra.mxu0 0
  %119 = vmatprep.subr.bf16.mxu0 0
  %120 = vmatpush1.bf16.msra.mxu0 0
  %121 = vmatprep.subr.bf16.mxu0 0
  %122 = vmatpush1.bf16.msra.mxu0 0
  %123 = vmatprep.mubr.bf16.mxu0 0
  %124 = vmatmul.mubr.bf16.gmra.mrb[0].mxu0 %v25
  %v125 = vpop.f32.mrb[0].mxu0
  %v126 = vadd.f32 0.0, %v125
  %v127 = vpop.f32.mrb[0].mxu0
  %v128 = vpop.f32.mrb[0].mxu0
  %v129 = vpop.f32.mrb[0].mxu0
  %130 = vdwg.mxu0
  %v131 = vld [vmem:[%s1] sm:$0xf]
  %v132 = vld [vmem:[%s1 + $0x4] sm:$0xf]
  %v133 = vld [vmem:[%s1 + $0x8] sm:$0xf]
  %v134 = vld [vmem:[%s1 + $0xc] sm:$0xf]
  %v135 = vld [vmem:[%s1 + $0x10] sm:$0xf]
  %v136 = vld [vmem:[%s1 + $0x14] sm:$0xf]
  %v137 = vld [vmem:[%s1 + $0x18] sm:$0xf]
  %v138 = vld [vmem:[%s1 + $0x1c] sm:$0xf]
  %v139 = vld [vmem:[%s1 + $0x20] sm:$0xf]
  %v140 = vld [vmem:[%s1 + $0x24] sm:$0xf]
  %v141 = vld [vmem:[%s1 + $0x28] sm:$0xf]
  %v142 = vld [vmem:[%s1 + $0x2c] sm:$0xf]
  %v143 = vld [vmem:[%s1 + $0x30] sm:$0xf]
  %v144 = vld [vmem:[%s1 + $0x34] sm:$0xf]
  %v145 = vld [vmem:[%s1 + $0x38] sm:$0xf]
  %v146 = vld [vmem:[%s1 + $0x3c] sm:$0xf]
  %v163 = vunpack.c.l.b16 %v131
  %v164 = vunpack.c.l.b16 %v132
  %v165 = vunpack.c.l.b16 %v133
  %v166 = vunpack.c.l.b16 %v134
  %v167 = vunpack.c.l.b16 %v135
  %v168 = vunpack.c.l.b16 %v136
  %v169 = vunpack.c.l.b16 %v137
  %v170 = vunpack.c.l.b16 %v138
  %v171 = vunpack.c.l.b16 %v139
  %v172 = vunpack.c.l.b16 %v140
  %v173 = vunpack.c.l.b16 %v141
  %v174 = vunpack.c.l.b16 %v142
  %v175 = vunpack.c.l.b16 %v143
  %v176 = vunpack.c.l.b16 %v144
  %v177 = vunpack.c.l.b16 %v145
  %v178 = vunpack.c.l.b16 %v146
  %v179 = vpack.c.b16 %v164, %v163
  %v180 = vpack.c.b16 %v166, %v165
  %v181 = vpack.c.b16 %v168, %v167
  %v182 = vpack.c.b16 %v170, %v169
  %v183 = vpack.c.b16 %v172, %v171
  %v184 = vpack.c.b16 %v174, %v173
  %v185 = vpack.c.b16 %v176, %v175
  %v186 = vpack.c.b16 %v178, %v177
  %195 = vmatprep.subr.bf16.mxu0 0
  %196 = vmatpush1.bf16.msra.mxu0 %v179
  %197 = vmatprep.subr.bf16.mxu0 0
  %198 = vmatpush1.bf16.msra.mxu0 %v180
  %199 = vmatprep.subr.bf16.mxu0 0
  %200 = vmatpush1.bf16.msra.mxu0 %v181
  %201 = vmatprep.subr.bf16.mxu0 0
  %202 = vmatpush1.bf16.msra.mxu0 %v182
  %203 = vmatprep.subr.bf16.mxu0 0
  %204 = vmatpush1.bf16.msra.mxu0 %v183
  %205 = vmatprep.subr.bf16.mxu0 0
  %206 = vmatpush1.bf16.msra.mxu0 %v184
  %207 = vmatprep.subr.bf16.mxu0 0
  %208 = vmatpush1.bf16.msra.mxu0 %v185
  %209 = vmatprep.subr.bf16.mxu0 0
  %210 = vmatpush1.bf16.msra.mxu0 %v186
  %211 = vmatprep.subr.bf16.mxu0 0
  %212 = vmatpush1.bf16.msra.mxu0 0
  %213 = vmatprep.subr.bf16.mxu0 0
  %214 = vmatpush1.bf16.msra.mxu0 0
  %215 = vmatprep.subr.bf16.mxu0 0
  %216 = vmatpush1.bf16.msra.mxu0 0
  %217 = vmatprep.subr.bf16.mxu0 0
  %218 = vmatpush1.bf16.msra.mxu0 0
  %219 = vmatprep.subr.bf16.mxu0 0
  %220 = vmatpush1.bf16.msra.mxu0 0
  %221 = vmatprep.subr.bf16.mxu0 0
  %222 = vmatpush1.bf16.msra.mxu0 0
  %223 = vmatprep.subr.bf16.mxu0 0
  %224 = vmatpush1.bf16.msra.mxu0 0
  %225 = vmatprep.subr.bf16.mxu0 0
  %226 = vmatpush1.bf16.msra.mxu0 0
  %227 = vmatprep.mubr.bf16.mxu0 0
  %228 = vmatmul.mubr.bf16.gmra.mrb[0].mxu0 %v25
  %v229 = vpop.f32.mrb[0].mxu0
  %v230 = vadd.f32 0.0, %v229
  %v231 = vpop.f32.mrb[0].mxu0
  %v232 = vpop.f32.mrb[0].mxu0
  %v233 = vpop.f32.mrb[0].mxu0
  %234 = vdwg.mxu0
  %v235 = vpack.c.bf16 %v230, %v126
  %v236 = vld [vmem:[%s2] sm:$0xf]
  %v237 = vld [vmem:[%s3] sm:$0xff]
  %239 = vset.pattern.permute.xlu0 0
  %240 = vperm.xlu0 %239, %v237
  %v241 = vpop.permute.xlu0 %240
  %vm243 = vcmask 195584
  %v245 = vsel %vm243, %v236, 0
  %vm247 = vcmask 1043456
  %v249 = vsel %vm247, %v25, 0
  %251 = vmatprep.subr.bf16.mxu0 0
  %252 = vmatpush1.bf16.msra.mxu0 %v235
  %253 = vmatprep.subr.bf16.mxu0 0
  %254 = vmatpush1.bf16.msra.mxu0 %v249
  %255 = vmatprep.subr.bf16.mxu0 0
  %256 = vmatpush1.bf16.msra.mxu0 0
  %257 = vmatprep.subr.bf16.mxu0 0
  %258 = vmatpush1.bf16.msra.mxu0 0
  %259 = vmatprep.subr.bf16.mxu0 0
  %260 = vmatpush1.bf16.msra.mxu0 0
  %261 = vmatprep.subr.bf16.mxu0 0
  %262 = vmatpush1.bf16.msra.mxu0 0
  %263 = vmatprep.subr.bf16.mxu0 0
  %264 = vmatpush1.bf16.msra.mxu0 0
  %265 = vmatprep.subr.bf16.mxu0 0
  %266 = vmatpush1.bf16.msra.mxu0 0
  %267 = vmatprep.subr.bf16.mxu0 0
  %268 = vmatpush1.bf16.msra.mxu0 0
  %269 = vmatprep.subr.bf16.mxu0 0
  %270 = vmatpush1.bf16.msra.mxu0 0
  %271 = vmatprep.subr.bf16.mxu0 0
  %272 = vmatpush1.bf16.msra.mxu0 0
  %273 = vmatprep.subr.bf16.mxu0 0
  %274 = vmatpush1.bf16.msra.mxu0 0
  %275 = vmatprep.subr.bf16.mxu0 0
  %276 = vmatpush1.bf16.msra.mxu0 0
  %277 = vmatprep.subr.bf16.mxu0 0
  %278 = vmatpush1.bf16.msra.mxu0 0
  %279 = vmatprep.subr.bf16.mxu0 0
  %280 = vmatpush1.bf16.msra.mxu0 0
  %281 = vmatprep.subr.bf16.mxu0 0
  %282 = vmatpush1.bf16.msra.mxu0 0
  %283 = vmatprep.mubr.bf16.mxu0 0
  %284 = vmatmul.mubr.bf16.gmra.mrb[0].mxu0 %v245
  %v285 = vpop.f32.mrb[0].mxu0
  %v286 = vadd.f32 %v241, %v285
  %v287 = vpop.f32.mrb[0].mxu0
  %v288 = vpop.f32.mrb[0].mxu0
  %v289 = vpop.f32.mrb[0].mxu0
  %290 = vdwg.mxu0
  %v291 = vmax.f32 %v286, 0.0
  %v292 = vpack.c.bf16 %v291, %v291
  %293 = vmatprep.subr.bf16.mxu0 0
  %294 = vmatpush1.bf16.msra.mxu0 %v75
  %295 = vmatprep.subr.bf16.mxu0 0
  %296 = vmatpush1.bf16.msra.mxu0 %v76
  %297 = vmatprep.subr.bf16.mxu0 0
  %298 = vmatpush1.bf16.msra.mxu0 %v77
  %299 = vmatprep.subr.bf16.mxu0 0
  %300 = vmatpush1.bf16.msra.mxu0 %v78
  %301 = vmatprep.subr.bf16.mxu0 0
  %302 = vmatpush1.bf16.msra.mxu0 %v79
  %303 = vmatprep.subr.bf16.mxu0 0
  %304 = vmatpush1.bf16.msra.mxu0 %v80
  %305 = vmatprep.subr.bf16.mxu0 0
  %306 = vmatpush1.bf16.msra.mxu0 %v81
  %307 = vmatprep.subr.bf16.mxu0 0
  %308 = vmatpush1.bf16.msra.mxu0 %v82
  %309 = vmatprep.subr.bf16.mxu0 0
  %310 = vmatpush1.bf16.msra.mxu0 0
  %311 = vmatprep.subr.bf16.mxu0 0
  %312 = vmatpush1.bf16.msra.mxu0 0
  %313 = vmatprep.subr.bf16.mxu0 0
  %314 = vmatpush1.bf16.msra.mxu0 0
  %315 = vmatprep.subr.bf16.mxu0 0
  %316 = vmatpush1.bf16.msra.mxu0 0
  %317 = vmatprep.subr.bf16.mxu0 0
  %318 = vmatpush1.bf16.msra.mxu0 0
  %319 = vmatprep.subr.bf16.mxu0 0
  %320 = vmatpush1.bf16.msra.mxu0 0
  %321 = vmatprep.subr.bf16.mxu0 0
  %322 = vmatpush1.bf16.msra.mxu0 0
  %323 = vmatprep.subr.bf16.mxu0 0
  %324 = vmatpush1.bf16.msra.mxu0 0
  %325 = vmatprep.mubr.bf16.mxu0 0
  %326 = vmatmul.mubr.bf16.gmra.mrb[0].mxu0 %v292
  %v327 = vpop.f32.mrb[0].mxu0
  %v328 = vadd.f32 0.0, %v327
  %v329 = vpop.f32.mrb[0].mxu0
  %v330 = vpop.f32.mrb[0].mxu0
  %v331 = vpop.f32.mrb[0].mxu0
  %332 = vdwg.mxu0
  %333 = vmatprep.subr.bf16.mxu0 0
  %334 = vmatpush1.bf16.msra.mxu0 %v179
  %335 = vmatprep.subr.bf16.mxu0 0
  %336 = vmatpush1.bf16.msra.mxu0 %v180
  %337 = vmatprep.subr.bf16.mxu0 0
  %338 = vmatpush1.bf16.msra.mxu0 %v181
  %339 = vmatprep.subr.bf16.mxu0 0
  %340 = vmatpush1.bf16.msra.mxu0 %v182
  %341 = vmatprep.subr.bf16.mxu0 0
  %342 = vmatpush1.bf16.msra.mxu0 %v183
  %343 = vmatprep.subr.bf16.mxu0 0
  %344 = vmatpush1.bf16.msra.mxu0 %v184
  %345 = vmatprep.subr.bf16.mxu0 0
  %346 = vmatpush1.bf16.msra.mxu0 %v185
  %347 = vmatprep.subr.bf16.mxu0 0
  %348 = vmatpush1.bf16.msra.mxu0 %v186
  %349 = vmatprep.subr.bf16.mxu0 0
  %350 = vmatpush1.bf16.msra.mxu0 0
  %351 = vmatprep.subr.bf16.mxu0 0
  %352 = vmatpush1.bf16.msra.mxu0 0
  %353 = vmatprep.subr.bf16.mxu0 0
  %354 = vmatpush1.bf16.msra.mxu0 0
  %355 = vmatprep.subr.bf16.mxu0 0
  %356 = vmatpush1.bf16.msra.mxu0 0
  %357 = vmatprep.subr.bf16.mxu0 0
  %358 = vmatpush1.bf16.msra.mxu0 0
  %359 = vmatprep.subr.bf16.mxu0 0
  %360 = vmatpush1.bf16.msra.mxu0 0
  %361 = vmatprep.subr.bf16.mxu0 0
  %362 = vmatpush1.bf16.msra.mxu0 0
  %363 = vmatprep.subr.bf16.mxu0 0
  %364 = vmatpush1.bf16.msra.mxu0 0
  %365 = vmatprep.mubr.bf16.mxu0 0
  %366 = vmatmul.mubr.bf16.gmra.mrb[0].mxu0 %v292
  %v367 = vpop.f32.mrb[0].mxu0
  %v368 = vadd.f32 0.0, %v367
  %v369 = vpop.f32.mrb[0].mxu0
  %v370 = vpop.f32.mrb[0].mxu0
  %v371 = vpop.f32.mrb[0].mxu0
  %372 = vdwg.mxu0
  %v373 = vpack.c.bf16 %v368, %v328
  %v374 = vld [vmem:[%s4] sm:$0xf]
  %v375 = vld [vmem:[%s5] sm:$0xff]
  %377 = vset.pattern.permute.xlu0 0
  %378 = vperm.xlu0 %377, %v375
  %v379 = vpop.permute.xlu0 %378
  %v382 = vsel %vm243, %v374, 0
  %v385 = vsel %vm247, %v292, 0
  %387 = vmatprep.subr.bf16.mxu0 0
  %388 = vmatpush1.bf16.msra.mxu0 %v373
  %389 = vmatprep.subr.bf16.mxu0 0
  %390 = vmatpush1.bf16.msra.mxu0 %v385
  %391 = vmatprep.subr.bf16.mxu0 0
  %392 = vmatpush1.bf16.msra.mxu0 0
  %393 = vmatprep.subr.bf16.mxu0 0
  %394 = vmatpush1.bf16.msra.mxu0 0
  %395 = vmatprep.subr.bf16.mxu0 0
  %396 = vmatpush1.bf16.msra.mxu0 0
  %397 = vmatprep.subr.bf16.mxu0 0
  %398 = vmatpush1.bf16.msra.mxu0 0
  %399 = vmatprep.subr.bf16.mxu0 0
  %400 = vmatpush1.bf16.msra.mxu0 0
  %401 = vmatprep.subr.bf16.mxu0 0
  %402 = vmatpush1.bf16.msra.mxu0 0
  %403 = vmatprep.subr.bf16.mxu0 0
  %404 = vmatpush1.bf16.msra.mxu0 0
  %405 = vmatprep.subr.bf16.mxu0 0
  %406 = vmatpush1.bf16.msra.mxu0 0
  %407 = vmatprep.subr.bf16.mxu0 0
  %408 = vmatpush1.bf16.msra.mxu0 0
  %409 = vmatprep.subr.bf16.mxu0 0
  %410 = vmatpush1.bf16.msra.mxu0 0
  %411 = vmatprep.subr.bf16.mxu0 0
  %412 = vmatpush1.bf16.msra.mxu0 0
  %413 = vmatprep.subr.bf16.mxu0 0
  %414 = vmatpush1.bf16.msra.mxu0 0
  %415 = vmatprep.subr.bf16.mxu0 0
  %416 = vmatpush1.bf16.msra.mxu0 0
  %417 = vmatprep.subr.bf16.mxu0 0
  %418 = vmatpush1.bf16.msra.mxu0 0
  %419 = vmatprep.mubr.bf16.mxu0 0
  %420 = vmatmul.mubr.bf16.gmra.mrb[0].mxu0 %v382
  %v421 = vpop.f32.mrb[0].mxu0
  %v422 = vadd.f32 %v379, %v421
  %v423 = vpop.f32.mrb[0].mxu0
  %v424 = vpop.f32.mrb[0].mxu0
  %v425 = vpop.f32.mrb[0].mxu0
  %426 = vdwg.mxu0
  %v427 = vmax.f32 %v422, 0.0
  %428 = vst [vmem:[%s6] sm:$0xff] %v427
  // Predicated region
  $region26: #{cnn1d_forward.1} parent=0 // pred_check
    _
  $region27: #{cnn1d_forward.1} parent=0 // pred_check_branch
    %430 = sbr.rel (0) target = $region29
  $region28: #{cnn1d_forward.1} parent=0 // pred_region
    _
  $region29: #{cnn1d_forward.1} parent=0 // pred_fallthru
    _
  // Predicated region
  $region30: #{cnn1d_forward.1} parent=0 // pred_check
    _
  $region31: #{cnn1d_forward.1} parent=0 // pred_check_branch
    %432 = sbr.rel (0) target = $region33
  $region32: #{cnn1d_forward.1} parent=0 // pred_region
    _
  $region33: #{cnn1d_forward.1} parent=0 // pred_fallthru
    _

</llo_original>
